<compile_context>
chip_gen: v7x
topology: tpu7x:2x2x1
jax: 0.10.0
libtpu: 0.0.40
codegen_flags: <defaults>
</compile_context>

<pallas_src>
import functools

import jax
import jax.numpy as jnp
from jax import lax
from jax.experimental import pallas as pl
from jax.experimental.pallas import tpu as pltpu

K = 7      # conv kernel size
PAD = 3    # conv padding


def _round_up(x, m):
    return (x + m - 1) // m * m


def _spatial_attn_kernel(w_ref, b_ref, x_ref, o_ref, slab_ref, *,
                         Bt, C, W, HWI, FPA, LP, CK):
    # w_ref   : VMEM (16, K) f32   conv weights, sublane s=c*K+kh, lane=kw
    # b_ref   : SMEM (1,)    f32   conv bias
    # x_ref   : VMEM (Bt, C, HWI)  Bt images, spatial flattened + 128-padded
    # o_ref   : VMEM (Bt, C, HWI)  output
    # slab_ref: VMEM (16, LP) f32  zero-haloed, dh-pre-shifted pooled maps
    f32 = jnp.float32
    out_dtype = o_ref.dtype

    # ---- hoisted, per-grid-step work ---------------------------------------
    # Zero the whole scratch once; the 14 interiors are rewritten per image and
    # the halos must stay zero (they absorb row over/under-run of the taps).
    slab_ref[...] = jnp.zeros((16, LP), f32)

    # Column index (i mod W) from an integer iota; 6 wrap masks built once.
    col = lax.broadcasted_iota(jnp.int32, (1, HWI), 1) % W
    masks = {}
    for dw in range(-PAD, PAD + 1):
        if dw < 0:
            masks[dw] = col >= -dw
        elif dw > 0:
            masks[dw] = col <= (W - 1 - dw)

    w_all = w_ref[...]                                     # (16, K) f32
    wcols = [w_all[:, kw:kw + 1] for kw in range(K)]       # 7 x (16, 1)
    bias = b_ref[0]

    # ---- per-image processing -----------------------------------------------
    for bi in range(Bt):
        # -- channel max / mean: running elementwise accumulators, single
        #    cross-sublane reduce at the end (keeps the stream on the VPU). ---
        if C <= CK:
            xc = x_ref[bi, 0:C, :].astype(f32)
            mx = jnp.max(xc, axis=0, keepdims=True)
            sm = jnp.sum(xc, axis=0, keepdims=True)
        else:
            nfull = C // CK
            rem = C - nfull * CK
            macc = x_ref[bi, 0:CK, :].astype(f32)
            sacc = macc
            if nfull <= 8:
                for k in range(1, nfull):
                    xc = x_ref[bi, k * CK:(k + 1) * CK, :].astype(f32)
                    macc = jnp.maximum(macc, xc)
                    sacc = sacc + xc
            else:
                def red_body(k, carry):
                    m, s = carry
                    c0 = pl.multiple_of(k * CK, CK)
                    xc = x_ref[bi, pl.ds(c0, CK), :].astype(f32)
                    return jnp.maximum(m, xc), s + xc
                macc, sacc = lax.fori_loop(1, nfull, red_body, (macc, sacc),
                                           unroll=4)
            mx = jnp.max(macc, axis=0, keepdims=True)
            sm = jnp.sum(sacc, axis=0, keepdims=True)
            if rem:
                xt = x_ref[bi, nfull * CK:C, :].astype(f32)
                mx = jnp.maximum(mx, jnp.max(xt, axis=0, keepdims=True))
                sm = sm + jnp.sum(xt, axis=0, keepdims=True)
        av = sm * f32(1.0 / C)                             # mean over channels

        # -- write the 14 pre-shifted interior copies: sublane s = c*7+kh holds
        #    the pooled map of channel c shifted by dh = kh-3 rows. -----------
        for c_in, row in ((0, mx), (1, av)):
            for kh in range(K):
                dh = kh - PAD
                s = c_in * K + kh
                start = FPA - dh * W                       # static, >= 0
                slab_ref[s:s + 1, start:start + HWI] = row

        # -- 7x7 conv: per kw, ONE (16, HWI) slab read, per-sublane weight
        #    multiply, one sublane reduce, one column-wrap mask. --------------
        conv = jnp.full((1, HWI), bias, dtype=f32)
        for kw in range(K):
            dw = kw - PAD
            rs = FPA + dw
            slab = slab_ref[:, rs:rs + HWI]                # (16, HWI)
            term = jnp.sum(slab * wcols[kw], axis=0, keepdims=True)
            if dw != 0:
                term = jnp.where(masks[dw], term, 0.0)
            conv = conv + term

        ms = jax.nn.sigmoid(conv).astype(out_dtype)        # (1, HWI)

        # -- broadcast multiply; broadcast hoisted out of the chunk loop. -----
        if C <= CK:
            ms_b = jnp.broadcast_to(ms, (C, HWI))
            o_ref[bi, 0:C, :] = ms_b * x_ref[bi, 0:C, :]
        else:
            nfull = C // CK
            rem = C - nfull * CK
            ms_b = jnp.broadcast_to(ms, (CK, HWI))
            if nfull <= 8:
                for k in range(nfull):
                    o_ref[bi, k * CK:(k + 1) * CK, :] = (
                        ms_b * x_ref[bi, k * CK:(k + 1) * CK, :])
            else:
                def mul_body(k, _):
                    c0 = pl.multiple_of(k * CK, CK)
                    o_ref[bi, pl.ds(c0, CK), :] = (
                        ms_b * x_ref[bi, pl.ds(c0, CK), :])
                    return 0
                lax.fori_loop(0, nfull, mul_body, 0)
            if rem:
                o_ref[bi, nfull * CK:C, :] = (
                    ms_b[0:rem] * x_ref[bi, nfull * CK:C, :])


def spatial_attention(x, conv_w, conv_b):
    """x: (B, C, H, W); conv_w: (1, 2, 7, 7); conv_b: (1,)."""
    B, C, H, W = x.shape
    HW = H * W
    HWI = _round_up(HW, 128)                 # lane-dense (padded) spatial dim
    FP = PAD * W + PAD                       # flat halo needed: |dh|*W + |dw|
    FPA = _round_up(FP, 128)                 # 128-aligned left halo
    LP = _round_up(FPA + HWI + FP, 128)      # scratch lane width

    x_flat = x.reshape(B, C, HW)
    if HWI != HW:
        # Zero padding: padded lanes pool to 0 = exactly the conv's zero pad.
        x_flat = jnp.pad(x_flat, ((0, 0), (0, 0), (0, HWI - HW)))

    # Weight layout (16, K): sublane s = c*K + kh, lane = kw; rows 14/15 zero.
    w = conv_w.reshape(2 * K, K).astype(jnp.float32)
    w_packed = jnp.concatenate(
        [w, jnp.zeros((16 - 2 * K, K), jnp.float32)], axis=0)
    b_flat = conv_b.reshape(-1).astype(jnp.float32)

    itemsize = x.dtype.itemsize
    # bf16 on v6e/v7x packs 16 rows per vreg; 8 for f32 (v5e upcasts anyway).
    CK = 16 if itemsize == 2 else 8

    # ---- batch blocking: ~2 MiB per block, but keep >= 2 grid steps so both
    # v7x TensorCores get work when B > 1. ------------------------------------
    per_image = C * HWI * itemsize
    bt_cap = max(1, (2 << 20) // per_image)
    Bt = 1
    for d in range(1, B + 1):
        if B % d == 0 and d <= bt_cap:
            Bt = d
    if B > 1 and B // Bt < 2:
        cands = [d for d in range(1, B)
                 if B % d == 0 and B // d >= 2 and d <= bt_cap]
        if cands:
            Bt = max(cands)
    grid = (B // Bt,)

    block_bytes = Bt * per_image
    scratch_bytes = 16 * LP * 4 + 16 * K * 4
    try:
        info = pltpu.get_tpu_info()
        vmem_cap = int(getattr(info, "vmem_capacity_bytes", 64 << 20))
    except Exception:
        vmem_cap = 64 << 20
    desired = 4 * block_bytes + scratch_bytes + (4 << 20)
    vmem_limit = int(min(max(desired, 32 << 20), (vmem_cap * 3) // 4))

    cost = pl.CostEstimate(
        flops=int(B * HWI * (3 * C + 4 * K * K + 8)),
        transcendentals=int(B * HWI),
        bytes_accessed=int(2 * B * C * HWI * itemsize),
    )

    kernel = functools.partial(
        _spatial_attn_kernel,
        Bt=Bt, C=C, W=W, HWI=HWI, FPA=FPA, LP=LP, CK=CK)

    out_flat = pl.pallas_call(
        kernel,
        out_shape=jax.ShapeDtypeStruct((B, C, HWI), x.dtype),
        grid_spec=pltpu.PrefetchScalarGridSpec(
            num_scalar_prefetch=0,
            grid=grid,
            in_specs=[
                pl.BlockSpec((16, K), lambda b: (0, 0)),               # weights
                pl.BlockSpec(memory_space=pltpu.MemorySpace.SMEM),     # bias
                pl.BlockSpec((Bt, C, HWI), lambda b: (b, 0, 0)),       # x
            ],
            out_specs=pl.BlockSpec((Bt, C, HWI), lambda b: (b, 0, 0)),
            scratch_shapes=[
                pltpu.VMEM((16, LP), jnp.float32),  # dh-pre-shifted pooled maps
            ],
        ),
        compiler_params=pltpu.CompilerParams(
            dimension_semantics=("parallel",),
            vmem_limit_bytes=vmem_limit),
        cost_estimate=cost,
    )(w_packed, b_flat, x_flat)

    out_flat = out_flat[:, :, :HW]
    return out_flat.reshape(B, C, H, W)


def spatial_attention_ref(x, conv_w, conv_b):
    """Pure-JAX reference mirroring the PyTorch module."""
    max_pool = jnp.max(x, axis=1, keepdims=True)
    avg_pool = jnp.mean(x, axis=1, keepdims=True)
    x_cat = jnp.concatenate([max_pool, avg_pool], axis=1)        # (B, 2, H, W)
    conv = jax.lax.conv_general_dilated(
        x_cat, conv_w, window_strides=(1, 1),
        padding=((PAD, PAD), (PAD, PAD)),
        dimension_numbers=("NCHW", "OIHW", "NCHW"))
    conv = conv + conv_b.reshape(1, -1, 1, 1)
    ms = jax.nn.sigmoid(conv)                                    # (B, 1, H, W)
    return ms * x


if __name__ == "__main__":
    B, C, H, W = 2, 4, 16, 16

    key = jax.random.PRNGKey(0)
    kx, kw_, kb = jax.random.split(key, 3)
    x = jax.random.normal(kx, (B, C, H, W), dtype=jnp.float32)
    # Deterministic "parameters" for nn.Conv2d(2, 1, 7, padding=3).
    conv_w = jax.random.normal(kw_, (1, 2, K, K), dtype=jnp.float32) * 0.1
    conv_b = jax.random.normal(kb, (1,), dtype=jnp.float32) * 0.1

    out = spatial_attention(x, conv_w, conv_b)
    out = jax.block_until_ready(out)

    ref = spatial_attention_ref(x, conv_w, conv_b)
    assert out.shape == (B, C, H, W)
    assert jnp.allclose(out, ref, atol=1e-4, rtol=1e-4), (
        float(jnp.max(jnp.abs(out - ref))))

    print("KERNEL_OK")
</pallas_src>

<mosaic_0001>
module attributes {stable_mosaic.version = 11 : i64} {
  func.func @_spatial_attn_kernel(%arg0: i32, %arg1: memref<16x7xf32, #tpu.memory_space<vmem>>, %arg2: memref<1xf32, #tpu.memory_space<smem>>, %arg3: memref<1x4x256xf32, #tpu.memory_space<vmem>>, %arg4: memref<1x4x256xf32, #tpu.memory_space<vmem>>, %arg5: memref<16x512xf32, #tpu.memory_space<vmem>>) attributes {dimension_semantics = [#tpu.dimension_semantics<parallel>], iteration_bounds = array<i64: 2>, scalar_prefetch = 0 : i64, scratch_operands = 1 : i64, tpu.core_type = #tpu.core_type<tc>, window_params = [{pipeline_mode = #tpu.pipeline_mode<synchronous>, transform_indices = @transform_0, window_bounds = array<i64: 16, 7>}, {transform_indices = @transform_1, window_bounds = array<i64: 1>}, {transform_indices = @transform_2, window_bounds = array<i64: 1, 4, 256>}, {transform_indices = @transform_3, window_bounds = array<i64: 1, 4, 256>}]} {
    %cst = arith.constant 0.000000e+00 : f32
    %0 = vector.broadcast %cst : f32 to vector<16x512xf32>
    %c0 = arith.constant 0 : index
    %c0_0 = arith.constant 0 : index
    %1 = vector.load %arg5[%c0, %c0_0] : memref<16x512xf32, #tpu.memory_space<vmem>>, vector<16x512xf32>
    tpu.vector_store %arg5[%c0, %c0_0], %0 {strides = array<i32>} : memref<16x512xf32, #tpu.memory_space<vmem>>, vector<16x512xf32>,
    %2 = tpu.iota {dimensions = array<i32: 1>} : vector<1x256xi32>
    %c16_i32 = arith.constant 16 : i32
    %c0_i32 = arith.constant 0 : i32
    %3 = arith.cmpi eq, %c16_i32, %c0_i32 : i32
    %c1_i32 = arith.constant 1 : i32
    %4 = arith.select %3, %c1_i32, %c16_i32 : i32
    %5 = vector.broadcast %4 : i32 to vector<1x256xi32>
    %6 = arith.remsi %2, %5 : vector<1x256xi32>
    %c0_i32_1 = arith.constant 0 : i32
    %7 = vector.broadcast %c0_i32_1 : i32 to vector<1x256xi32>
    %8 = arith.cmpi ne, %6, %7 : vector<1x256xi32>
    %c0_i32_2 = arith.constant 0 : i32
    %9 = vector.broadcast %c0_i32_2 : i32 to vector<1x256xi32>
    %10 = arith.cmpi slt, %6, %9 : vector<1x256xi32>
    %c0_i32_3 = arith.constant 0 : i32
    %11 = arith.cmpi slt, %4, %c0_i32_3 : i32
    %12 = vector.broadcast %11 : i1 to vector<1x256xi1>
    %13 = vector.broadcast %12 : vector<1x256xi1> to vector<1x256xi1>
    %14 = arith.xori %10, %13 : vector<1x256xi1>
    %15 = arith.andi %14, %8 : vector<1x256xi1>
    %16 = vector.broadcast %4 : i32 to vector<1x256xi32>
    %17 = arith.addi %6, %16 : vector<1x256xi32>
    %18 = arith.select %15, %17, %6 : vector<1x256xi1>, vector<1x256xi32>
    %c3_i32 = arith.constant 3 : i32
    %19 = vector.broadcast %c3_i32 : i32 to vector<1x256xi32>
    %20 = arith.cmpi sge, %18, %19 : vector<1x256xi32>
    %c2_i32 = arith.constant 2 : i32
    %21 = vector.broadcast %c2_i32 : i32 to vector<1x256xi32>
    %22 = arith.cmpi sge, %18, %21 : vector<1x256xi32>
    %c1_i32_4 = arith.constant 1 : i32
    %23 = vector.broadcast %c1_i32_4 : i32 to vector<1x256xi32>
    %24 = arith.cmpi sge, %18, %23 : vector<1x256xi32>
    %c14_i32 = arith.constant 14 : i32
    %25 = vector.broadcast %c14_i32 : i32 to vector<1x256xi32>
    %26 = arith.cmpi sle, %18, %25 : vector<1x256xi32>
    %c13_i32 = arith.constant 13 : i32
    %27 = vector.broadcast %c13_i32 : i32 to vector<1x256xi32>
    %28 = arith.cmpi sle, %18, %27 : vector<1x256xi32>
    %c12_i32 = arith.constant 12 : i32
    %29 = vector.broadcast %c12_i32 : i32 to vector<1x256xi32>
    %30 = arith.cmpi sle, %18, %29 : vector<1x256xi32>
    %c0_5 = arith.constant 0 : index
    %c0_6 = arith.constant 0 : index
    %31 = vector.load %arg1[%c0_5, %c0_6] : memref<16x7xf32, #tpu.memory_space<vmem>>, vector<16x7xf32>
    %32 = vector.extract_strided_slice %31 {offsets = [0, 0], sizes = [16, 1], strides = [1, 1]} : vector<16x7xf32> to vector<16x1xf32>
    %33 = vector.extract_strided_slice %31 {offsets = [0, 1], sizes = [16, 1], strides = [1, 1]} : vector<16x7xf32> to vector<16x1xf32>
    %34 = vector.extract_strided_slice %31 {offsets = [0, 2], sizes = [16, 1], strides = [1, 1]} : vector<16x7xf32> to vector<16x1xf32>
    %35 = vector.extract_strided_slice %31 {offsets = [0, 3], sizes = [16, 1], strides = [1, 1]} : vector<16x7xf32> to vector<16x1xf32>
    %36 = vector.extract_strided_slice %31 {offsets = [0, 4], sizes = [16, 1], strides = [1, 1]} : vector<16x7xf32> to vector<16x1xf32>
    %37 = vector.extract_strided_slice %31 {offsets = [0, 5], sizes = [16, 1], strides = [1, 1]} : vector<16x7xf32> to vector<16x1xf32>
    %38 = vector.extract_strided_slice %31 {offsets = [0, 6], sizes = [16, 1], strides = [1, 1]} : vector<16x7xf32> to vector<16x1xf32>
    %c0_7 = arith.constant 0 : index
    %39 = memref.load %arg2[%c0_7] : memref<1xf32, #tpu.memory_space<smem>>
    %c0_8 = arith.constant 0 : index
    %c0_9 = arith.constant 0 : index
    %c0_10 = arith.constant 0 : index
    %40 = vector.load %arg3[%c0_8, %c0_9, %c0_10] : memref<1x4x256xf32, #tpu.memory_space<vmem>>, vector<1x4x256xf32>
    %41 = vector.shape_cast %40 : vector<1x4x256xf32> to vector<4x256xf32>
    %cst_11 = arith.constant dense<0xFF800000> : vector<256xf32>
    %42 = vector.multi_reduction <maximumf>, %41, %cst_11 [0] : vector<4x256xf32> to vector<256xf32>
    %43 = vector.shape_cast %42 : vector<256xf32> to vector<1x256xf32>
    %cst_12 = arith.constant dense<0.000000e+00> : vector<256xf32>
    %44 = vector.multi_reduction <add>, %41, %cst_12 [0] : vector<4x256xf32> to vector<256xf32>
    %45 = vector.shape_cast %44 : vector<256xf32> to vector<1x256xf32>
    %cst_13 = arith.constant 2.500000e-01 : f32
    %46 = vector.broadcast %cst_13 : f32 to vector<1x256xf32>
    %47 = arith.mulf %45, %46 : vector<1x256xf32>
    %c0_14 = arith.constant 0 : index
    %c176 = arith.constant 176 : index
    %48 = vector.load %arg5[%c0_14, %c176] : memref<16x512xf32, #tpu.memory_space<vmem>>, vector<1x256xf32>
    tpu.vector_store %arg5[%c0_14, %c176], %43 {strides = array<i32>} : memref<16x512xf32, #tpu.memory_space<vmem>>, vector<1x256xf32>,
    %c1 = arith.constant 1 : index
    %c160 = arith.constant 160 : index
    %49 = vector.load %arg5[%c1, %c160] : memref<16x512xf32, #tpu.memory_space<vmem>>, vector<1x256xf32>
    tpu.vector_store %arg5[%c1, %c160], %43 {strides = array<i32>} : memref<16x512xf32, #tpu.memory_space<vmem>>, vector<1x256xf32>,
    %c2 = arith.constant 2 : index
    %c144 = arith.constant 144 : index
    %50 = vector.load %arg5[%c2, %c144] : memref<16x512xf32, #tpu.memory_space<vmem>>, vector<1x256xf32>
    tpu.vector_store %arg5[%c2, %c144], %43 {strides = array<i32>} : memref<16x512xf32, #tpu.memory_space<vmem>>, vector<1x256xf32>,
    %c3 = arith.constant 3 : index
    %c128 = arith.constant 128 : index
    %51 = vector.load %arg5[%c3, %c128] : memref<16x512xf32, #tpu.memory_space<vmem>>, vector<1x256xf32>
    tpu.vector_store %arg5[%c3, %c128], %43 {strides = array<i32>} : memref<16x512xf32, #tpu.memory_space<vmem>>, vector<1x256xf32>,
    %c4 = arith.constant 4 : index
    %c112 = arith.constant 112 : index
    %52 = vector.load %arg5[%c4, %c112] : memref<16x512xf32, #tpu.memory_space<vmem>>, vector<1x256xf32>
    tpu.vector_store %arg5[%c4, %c112], %43 {strides = array<i32>} : memref<16x512xf32, #tpu.memory_space<vmem>>, vector<1x256xf32>,
    %c5 = arith.constant 5 : index
    %c96 = arith.constant 96 : index
    %53 = vector.load %arg5[%c5, %c96] : memref<16x512xf32, #tpu.memory_space<vmem>>, vector<1x256xf32>
    tpu.vector_store %arg5[%c5, %c96], %43 {strides = array<i32>} : memref<16x512xf32, #tpu.memory_space<vmem>>, vector<1x256xf32>,
    %c6 = arith.constant 6 : index
    %c80 = arith.constant 80 : index
    %54 = vector.load %arg5[%c6, %c80] : memref<16x512xf32, #tpu.memory_space<vmem>>, vector<1x256xf32>
    tpu.vector_store %arg5[%c6, %c80], %43 {strides = array<i32>} : memref<16x512xf32, #tpu.memory_space<vmem>>, vector<1x256xf32>,
    %c7 = arith.constant 7 : index
    %c176_15 = arith.constant 176 : index
    %55 = vector.load %arg5[%c7, %c176_15] : memref<16x512xf32, #tpu.memory_space<vmem>>, vector<1x256xf32>
    tpu.vector_store %arg5[%c7, %c176_15], %47 {strides = array<i32>} : memref<16x512xf32, #tpu.memory_space<vmem>>, vector<1x256xf32>,
    %c8 = arith.constant 8 : index
    %c160_16 = arith.constant 160 : index
    %56 = vector.load %arg5[%c8, %c160_16] : memref<16x512xf32, #tpu.memory_space<vmem>>, vector<1x256xf32>
    tpu.vector_store %arg5[%c8, %c160_16], %47 {strides = array<i32>} : memref<16x512xf32, #tpu.memory_space<vmem>>, vector<1x256xf32>,
    %c9 = arith.constant 9 : index
    %c144_17 = arith.constant 144 : index
    %57 = vector.load %arg5[%c9, %c144_17] : memref<16x512xf32, #tpu.memory_space<vmem>>, vector<1x256xf32>
    tpu.vector_store %arg5[%c9, %c144_17], %47 {strides = array<i32>} : memref<16x512xf32, #tpu.memory_space<vmem>>, vector<1x256xf32>,
    %c10 = arith.constant 10 : index
    %c128_18 = arith.constant 128 : index
    %58 = vector.load %arg5[%c10, %c128_18] : memref<16x512xf32, #tpu.memory_space<vmem>>, vector<1x256xf32>
    tpu.vector_store %arg5[%c10, %c128_18], %47 {strides = array<i32>} : memref<16x512xf32, #tpu.memory_space<vmem>>, vector<1x256xf32>,
    %c11 = arith.constant 11 : index
    %c112_19 = arith.constant 112 : index
    %59 = vector.load %arg5[%c11, %c112_19] : memref<16x512xf32, #tpu.memory_space<vmem>>, vector<1x256xf32>
    tpu.vector_store %arg5[%c11, %c112_19], %47 {strides = array<i32>} : memref<16x512xf32, #tpu.memory_space<vmem>>, vector<1x256xf32>,
    %c12 = arith.constant 12 : index
    %c96_20 = arith.constant 96 : index
    %60 = vector.load %arg5[%c12, %c96_20] : memref<16x512xf32, #tpu.memory_space<vmem>>, vector<1x256xf32>
    tpu.vector_store %arg5[%c12, %c96_20], %47 {strides = array<i32>} : memref<16x512xf32, #tpu.memory_space<vmem>>, vector<1x256xf32>,
    %c13 = arith.constant 13 : index
    %c80_21 = arith.constant 80 : index
    %61 = vector.load %arg5[%c13, %c80_21] : memref<16x512xf32, #tpu.memory_space<vmem>>, vector<1x256xf32>
    tpu.vector_store %arg5[%c13, %c80_21], %47 {strides = array<i32>} : memref<16x512xf32, #tpu.memory_space<vmem>>, vector<1x256xf32>,
    %62 = vector.broadcast %39 : f32 to vector<1x256xf32>
    %c0_22 = arith.constant 0 : index
    %c125 = arith.constant 125 : index
    %63 = vector.load %arg5[%c0_22, %c125] : memref<16x512xf32, #tpu.memory_space<vmem>>, vector<16x256xf32>
    %64 = vector.broadcast %32 : vector<16x1xf32> to vector<16x256xf32>
    %65 = arith.mulf %63, %64 : vector<16x256xf32>
    %cst_23 = arith.constant dense<0.000000e+00> : vector<256xf32>
    %66 = vector.multi_reduction <add>, %65, %cst_23 [0] : vector<16x256xf32> to vector<256xf32>
    %67 = vector.shape_cast %66 : vector<256xf32> to vector<1x256xf32>
    %cst_24 = arith.constant 0.000000e+00 : f32
    %68 = vector.broadcast %cst_24 : f32 to vector<1x256xf32>
    %69 = arith.select %20, %67, %68 : vector<1x256xi1>, vector<1x256xf32>
    %70 = arith.addf %62, %69 : vector<1x256xf32>
    %c0_25 = arith.constant 0 : index
    %c126 = arith.constant 126 : index
    %71 = vector.load %arg5[%c0_25, %c126] : memref<16x512xf32, #tpu.memory_space<vmem>>, vector<16x256xf32>
    %72 = vector.broadcast %33 : vector<16x1xf32> to vector<16x256xf32>
    %73 = arith.mulf %71, %72 : vector<16x256xf32>
    %cst_26 = arith.constant dense<0.000000e+00> : vector<256xf32>
    %74 = vector.multi_reduction <add>, %73, %cst_26 [0] : vector<16x256xf32> to vector<256xf32>
    %75 = vector.shape_cast %74 : vector<256xf32> to vector<1x256xf32>
    %cst_27 = arith.constant 0.000000e+00 : f32
    %76 = vector.broadcast %cst_27 : f32 to vector<1x256xf32>
    %77 = arith.select %22, %75, %76 : vector<1x256xi1>, vector<1x256xf32>
    %78 = arith.addf %70, %77 : vector<1x256xf32>
    %c0_28 = arith.constant 0 : index
    %c127 = arith.constant 127 : index
    %79 = vector.load %arg5[%c0_28, %c127] : memref<16x512xf32, #tpu.memory_space<vmem>>, vector<16x256xf32>
    %80 = vector.broadcast %34 : vector<16x1xf32> to vector<16x256xf32>
    %81 = arith.mulf %79, %80 : vector<16x256xf32>
    %cst_29 = arith.constant dense<0.000000e+00> : vector<256xf32>
    %82 = vector.multi_reduction <add>, %81, %cst_29 [0] : vector<16x256xf32> to vector<256xf32>
    %83 = vector.shape_cast %82 : vector<256xf32> to vector<1x256xf32>
    %cst_30 = arith.constant 0.000000e+00 : f32
    %84 = vector.broadcast %cst_30 : f32 to vector<1x256xf32>
    %85 = arith.select %24, %83, %84 : vector<1x256xi1>, vector<1x256xf32>
    %86 = arith.addf %78, %85 : vector<1x256xf32>
    %c0_31 = arith.constant 0 : index
    %c128_32 = arith.constant 128 : index
    %87 = vector.load %arg5[%c0_31, %c128_32] : memref<16x512xf32, #tpu.memory_space<vmem>>, vector<16x256xf32>
    %88 = vector.broadcast %35 : vector<16x1xf32> to vector<16x256xf32>
    %89 = arith.mulf %87, %88 : vector<16x256xf32>
    %cst_33 = arith.constant dense<0.000000e+00> : vector<256xf32>
    %90 = vector.multi_reduction <add>, %89, %cst_33 [0] : vector<16x256xf32> to vector<256xf32>
    %91 = vector.shape_cast %90 : vector<256xf32> to vector<1x256xf32>
    %92 = arith.addf %86, %91 : vector<1x256xf32>
    %c0_34 = arith.constant 0 : index
    %c129 = arith.constant 129 : index
    %93 = vector.load %arg5[%c0_34, %c129] : memref<16x512xf32, #tpu.memory_space<vmem>>, vector<16x256xf32>
    %94 = vector.broadcast %36 : vector<16x1xf32> to vector<16x256xf32>
    %95 = arith.mulf %93, %94 : vector<16x256xf32>
    %cst_35 = arith.constant dense<0.000000e+00> : vector<256xf32>
    %96 = vector.multi_reduction <add>, %95, %cst_35 [0] : vector<16x256xf32> to vector<256xf32>
    %97 = vector.shape_cast %96 : vector<256xf32> to vector<1x256xf32>
    %cst_36 = arith.constant 0.000000e+00 : f32
    %98 = vector.broadcast %cst_36 : f32 to vector<1x256xf32>
    %99 = arith.select %26, %97, %98 : vector<1x256xi1>, vector<1x256xf32>
    %100 = arith.addf %92, %99 : vector<1x256xf32>
    %c0_37 = arith.constant 0 : index
    %c130 = arith.constant 130 : index
    %101 = vector.load %arg5[%c0_37, %c130] : memref<16x512xf32, #tpu.memory_space<vmem>>, vector<16x256xf32>
    %102 = vector.broadcast %37 : vector<16x1xf32> to vector<16x256xf32>
    %103 = arith.mulf %101, %102 : vector<16x256xf32>
    %cst_38 = arith.constant dense<0.000000e+00> : vector<256xf32>
    %104 = vector.multi_reduction <add>, %103, %cst_38 [0] : vector<16x256xf32> to vector<256xf32>
    %105 = vector.shape_cast %104 : vector<256xf32> to vector<1x256xf32>
    %cst_39 = arith.constant 0.000000e+00 : f32
    %106 = vector.broadcast %cst_39 : f32 to vector<1x256xf32>
    %107 = arith.select %28, %105, %106 : vector<1x256xi1>, vector<1x256xf32>
    %108 = arith.addf %100, %107 : vector<1x256xf32>
    %c0_40 = arith.constant 0 : index
    %c131 = arith.constant 131 : index
    %109 = vector.load %arg5[%c0_40, %c131] : memref<16x512xf32, #tpu.memory_space<vmem>>, vector<16x256xf32>
    %110 = vector.broadcast %38 : vector<16x1xf32> to vector<16x256xf32>
    %111 = arith.mulf %109, %110 : vector<16x256xf32>
    %cst_41 = arith.constant dense<0.000000e+00> : vector<256xf32>
    %112 = vector.multi_reduction <add>, %111, %cst_41 [0] : vector<16x256xf32> to vector<256xf32>
    %113 = vector.shape_cast %112 : vector<256xf32> to vector<1x256xf32>
    %cst_42 = arith.constant 0.000000e+00 : f32
    %114 = vector.broadcast %cst_42 : f32 to vector<1x256xf32>
    %115 = arith.select %30, %113, %114 : vector<1x256xi1>, vector<1x256xf32>
    %116 = arith.addf %108, %115 : vector<1x256xf32>
    %117 = arith.negf %116 : vector<1x256xf32>
    %118 = math.exp %117 : vector<1x256xf32>
    %cst_43 = arith.constant 1.000000e+00 : f32
    %119 = vector.broadcast %cst_43 : f32 to vector<1x256xf32>
    %120 = arith.addf %119, %118 : vector<1x256xf32>
    %121 = arith.divf %119, %120 : vector<1x256xf32>
    %122 = vector.shape_cast %121 : vector<1x256xf32> to vector<1x256xf32>
    %123 = vector.broadcast %122 : vector<1x256xf32> to vector<4x256xf32>
    %c0_44 = arith.constant 0 : index
    %c0_45 = arith.constant 0 : index
    %c0_46 = arith.constant 0 : index
    %124 = vector.load %arg3[%c0_44, %c0_45, %c0_46] : memref<1x4x256xf32, #tpu.memory_space<vmem>>, vector<1x4x256xf32>
    %125 = vector.shape_cast %124 : vector<1x4x256xf32> to vector<4x256xf32>
    %126 = arith.mulf %123, %125 : vector<4x256xf32>
    %c0_47 = arith.constant 0 : index
    %c0_48 = arith.constant 0 : index
    %c0_49 = arith.constant 0 : index
    %127 = vector.load %arg4[%c0_47, %c0_48, %c0_49] : memref<1x4x256xf32, #tpu.memory_space<vmem>>, vector<1x4x256xf32>
    %128 = vector.shape_cast %127 : vector<1x4x256xf32> to vector<4x256xf32>
    %129 = vector.shape_cast %126 : vector<4x256xf32> to vector<1x4x256xf32>
    tpu.vector_store %arg4[%c0_47, %c0_48, %c0_49], %129 {strides = array<i32>} : memref<1x4x256xf32, #tpu.memory_space<vmem>>, vector<1x4x256xf32>,
    return
  }
  func.func @transform_0(%arg0: i32) -> (i32, i32) {
    %c0_i32 = arith.constant 0 : i32
    %c0_i32_0 = arith.constant 0 : i32
    %c0_i32_1 = arith.constant 0 : i32
    return %c0_i32, %c0_i32_0 : i32, i32
  }
  func.func @transform_1(%arg0: i32) -> i32 {
    %c0_i32 = arith.constant 0 : i32
    %c0_i32_0 = arith.constant 0 : i32
    return %c0_i32 : i32
  }
  func.func @transform_2(%arg0: i32) -> (i32, i32, i32) {
    %c0_i32 = arith.constant 0 : i32
    %c0_i32_0 = arith.constant 0 : i32
    %c0_i32_1 = arith.constant 0 : i32
    return %arg0, %c0_i32, %c0_i32_0 : i32, i32, i32
  }
  func.func @transform_3(%arg0: i32) -> (i32, i32, i32) {
    %c0_i32 = arith.constant 0 : i32
    %c0_i32_0 = arith.constant 0 : i32
    %c0_i32_1 = arith.constant 0 : i32
    return %arg0, %c0_i32, %c0_i32_0 : i32, i32, i32
  }
}

</mosaic_0001>

<llo_original>
// kernel: tpu_custom_call.1
$region0: #{tpu_custom_call.1}
  #allocation0 [shape = 'u32[]', space=smem, size = 0x4, offset = 0x4, fixed_abs, tag = 'smem constant byte address 0x4 - core index']
  #allocation1 [shape = 'u32[144,128]{1,0:T(1,128)}', space=vmem, size = 0x12000, scoped, tag = 'internal scratch']
  #allocation2 [shape = 'f32[16,512]{1,0:T(8,128)}', space=vmem, size = 0x8000, scoped, tag = 'scratch operand']
  #allocation3 [shape = 'f32[1]{0:T(128)S(6)}', space=smem, size = 0x200, scoped, tag = 'scoped memory for tpu_custom_call.1']
  %s0 = inlined_call_operand.vmem [shape: f32[16,7], index: 0, kind: input, shape index: {}]
  %s1 = inlined_call_operand.<no memory space> [shape: f32[1], index: 1, kind: input, shape index: {}]
  %s2 = inlined_call_operand.vmem [shape: f32[2,4,256], index: 2, kind: input, shape index: {}]
  %s3 = inlined_call_operand.hbm [shape: f32[2,4,256], index: 3, kind: output, shape index: {}]
  %s4 = sld [smem:[#allocation0]]
  $region45: #{tpu_custom_call.1} parent=0
    _
  %s6 = ssub.s32 1, %s4
  %s7 = scalar_select 0, %s6, %s4
  %8 = sst [smem:[#allocation3]] %s1
  $region1: #{tpu_custom_call.1} parent=0
    #allocation4 [shape = 'u8[8192]{0}', space=vmem, size = 0x2000, scoped, tag = 'output window, operand 0']
    #allocation5 [shape = 's32[2]{0}', space=sflag, size = 0x8, scoped, tag = 'scoped memory for tpu_custom_call.1']
    %9 = vsyncpa [#allocation5], 0
    %s10 = scalar_lea.sflag [#allocation5], 1
    %11 = vsyncpa %s10, 0
    loop: start=0, step=1, limit=4
    $region2: #{tpu_custom_call.1} parent=1 // loop_pre_header
      _
    $region3: #{tpu_custom_call.1} parent=1 // loop_header
      %s13 = sphi 0, %s17
      %p14 = scmp.ge.s32.totalorder %s13, 4
      %s21 = sphi 0, %s21
      %s23 = sphi 0, %s21
      %s24 = sphi 0, %s23
      %s38 = sphi 0, %s24
      %s42 = sphi 0, %s42
      %s44 = sphi 0, %s42
      %s45 = sphi 0, %s44
      %s59 = sphi 0, %s45
      %s65 = sphi 0, %s67
      %s68 = sphi 0, %s65
      %s69 = sphi 0, %s68
      %s85 = sphi 0, %s69
      %s91 = sphi 0, %s93
      %s94 = sphi 0, %s91
      %s95 = sphi 0, %s94
      %s111 = sphi 0, %s95
    $region4: #{tpu_custom_call.1} parent=1 // loop_header_branch
      %16 = sbr.rel (%p14) target = $region8
    $region5: #{tpu_custom_call.1} parent=1 // loop_body
      %s18 = ssub.s32 %s13, 1
      %s19 = ssub.s32 %s13, 2
      %s20 = sadd.s32 %s13, 1
      %s22 = sadd.s32 %s21, 1
      %p25 = scmp.eq.s32.totalorder %s13, 1
      %p26 = scmp.ne.s32.totalorder %s21, %s23
      %p27 = scmp.eq.s32.totalorder %s13, 0
      %p28 = por %p26, %p27
      %p29 = scmp.ne.s32.totalorder %s21, %s23
      %p30 = scmp.eq.s32.totalorder %s18, 1
      %p31 = por %p29, %p30
      %p32 = scmp.ne.s32.totalorder %s23, %s24
      %p33 = scmp.eq.s32.totalorder %s18, 0
      %p34 = por %p32, %p33
      %p35 = scmp.ne.s32.totalorder %s23, %s24
      %p36 = scmp.eq.s32.totalorder %s19, 1
      %p37 = por %p35, %p36
      %p39 = scmp.ne.s32.totalorder %s24, %s38
      %p40 = scmp.eq.s32.totalorder %s19, 0
      %p41 = por %p39, %p40
      %s43 = sadd.s32 %s42, 1
      %p46 = scmp.eq.s32.totalorder %s13, 1
      %p47 = scmp.ne.s32.totalorder %s42, %s44
      %p48 = scmp.eq.s32.totalorder %s13, 0
      %p49 = por %p47, %p48
      %p50 = scmp.ne.s32.totalorder %s42, %s44
      %p51 = scmp.eq.s32.totalorder %s18, 1
      %p52 = por %p50, %p51
      %p53 = scmp.ne.s32.totalorder %s44, %s45
      %p54 = scmp.eq.s32.totalorder %s18, 0
      %p55 = por %p53, %p54
      %p56 = scmp.ne.s32.totalorder %s44, %s45
      %p57 = scmp.eq.s32.totalorder %s19, 1
      %p58 = por %p56, %p57
      %p60 = scmp.ne.s32.totalorder %s45, %s59
      %p61 = scmp.eq.s32.totalorder %s19, 0
      %p62 = por %p60, %p61
      %s63 = ssub.s32 %s13, %s20
      %p64 = scmp.eq.s32.totalorder %s63, 0
      %s66 = sadd.s32 %s65, 1
      %s67 = scalar_select %p64, %s65, %s66
      %p70 = pneg %p64
      %p71 = scmp.eq.s32.totalorder %s13, 1
      %p72 = por %p70, %p71
      %p73 = scmp.ne.s32.totalorder %s65, %s68
      %p74 = scmp.eq.s32.totalorder %s13, 0
      %p75 = por %p73, %p74
      %p76 = scmp.ne.s32.totalorder %s65, %s68
      %p77 = scmp.eq.s32.totalorder %s18, 1
      %p78 = por %p76, %p77
      %p79 = scmp.ne.s32.totalorder %s68, %s69
      %p80 = scmp.eq.s32.totalorder %s18, 0
      %p81 = por %p79, %p80
      %p82 = scmp.ne.s32.totalorder %s68, %s69
      %p83 = scmp.eq.s32.totalorder %s19, 1
      %p84 = por %p82, %p83
      %p86 = scmp.ne.s32.totalorder %s69, %s85
      %p87 = scmp.eq.s32.totalorder %s19, 0
      %p88 = por %p86, %p87
      %s89 = ssub.s32 %s13, %s20
      %p90 = scmp.eq.s32.totalorder %s89, 0
      %s92 = sadd.s32 %s91, 1
      %s93 = scalar_select %p90, %s91, %s92
      %p96 = pneg %p90
      %p97 = scmp.eq.s32.totalorder %s13, 1
      %p98 = por %p96, %p97
      %p99 = scmp.ne.s32.totalorder %s91, %s94
      %p100 = scmp.eq.s32.totalorder %s13, 0
      %p101 = por %p99, %p100
      %p102 = scmp.ne.s32.totalorder %s91, %s94
      %p103 = scmp.eq.s32.totalorder %s18, 1
      %p104 = por %p102, %p103
      %p105 = scmp.ne.s32.totalorder %s94, %s95
      %p106 = scmp.eq.s32.totalorder %s18, 0
      %p107 = por %p105, %p106
      %p108 = scmp.ne.s32.totalorder %s94, %s95
      %p109 = scmp.eq.s32.totalorder %s19, 1
      %p110 = por %p108, %p109
      %p112 = scmp.ne.s32.totalorder %s95, %s111
      %p113 = scmp.eq.s32.totalorder %s19, 0
      %p114 = por %p112, %p113
      %p115 = scmp.le.s32.totalorder 1, %s13
      %p116 = scmp.lt.s32.totalorder %s13, 3
      %p117 = pnand %p115, %p116
      %p118 = pneg %p117
      // Predicated region
      $region9: #{tpu_custom_call.1} parent=5 // pred_check
        _
      $region10: #{tpu_custom_call.1} parent=5 // pred_check_branch
        %120 = sbr.rel (%p117) target = $region12
      $region11: #{tpu_custom_call.1} parent=5 // pred_region
        %s121 = ssub.s32 %s13, 1
        // Predicated region
        $region13: #{tpu_custom_call.1} parent=11 // pred_check
          %p122 = pneg %p34
        $region14: #{tpu_custom_call.1} parent=11 // pred_check_branch
          %124 = sbr.rel (%p122) target = $region16
        $region15: #{tpu_custom_call.1} parent=11 // pred_region
          _
        $region16: #{tpu_custom_call.1} parent=11 // pred_fallthru
          _
        // Predicated region
        $region17: #{tpu_custom_call.1} parent=11 // pred_check
          %p125 = pneg %p55
        $region18: #{tpu_custom_call.1} parent=11 // pred_check_branch
          %127 = sbr.rel (%p125) target = $region20
        $region19: #{tpu_custom_call.1} parent=11 // pred_region
          _
        $region20: #{tpu_custom_call.1} parent=11 // pred_fallthru
          _
      $region12: #{tpu_custom_call.1} parent=5 // pred_fallthru
        _
      %p128 = scmp.lt.s32.totalorder %s13, 2
      // Predicated region
      $region21: #{tpu_custom_call.1} parent=5 // pred_check
        %p129 = pneg %p128
      $region22: #{tpu_custom_call.1} parent=5 // pred_check_branch
        %131 = sbr.rel (%p129) target = $region24
      $region23: #{tpu_custom_call.1} parent=5 // pred_region
        // Predicated region
        $region25: #{tpu_custom_call.1} parent=23 // pred_check
          %p132 = pneg %p75
        $region26: #{tpu_custom_call.1} parent=23 // pred_check_branch
          %134 = sbr.rel (%p132) target = $region28
        $region27: #{tpu_custom_call.1} parent=23 // pred_region
          %p135 = scmp.lt.s32.totalorder %s13, 1
          %s136 = scalar_select %p135, %s13, 1
          %s137 = smul.addr %s136, 2
          %s138 = smul.addr %s137, 4
          %s139 = scalar_lea.vmem %s2, %s138
        $region28: #{tpu_custom_call.1} parent=23 // pred_fallthru
          _
      $region24: #{tpu_custom_call.1} parent=5 // pred_fallthru
        _
      %p140 = scmp.le.s32.totalorder 1, %s13
      %p141 = scmp.lt.s32.totalorder %s13, 3
      %p142 = pnand %p140, %p141
      %p143 = pneg %p142
      // Predicated region
      $region29: #{tpu_custom_call.1} parent=5 // pred_check
        _
      $region30: #{tpu_custom_call.1} parent=5 // pred_check_branch
        %145 = sbr.rel (%p142) target = $region32
      $region31: #{tpu_custom_call.1} parent=5 // pred_region
        %s146 = ssub.s32 %s13, 1
        %p147 = pneg %p34
        %p148 = pneg %p31
        %p149 = pneg %p55
        %p150 = pneg %p52
        %p151 = scmp.lt.s32.totalorder %s18, 1
        %s152 = scalar_select %p151, %s18, 1
        %s153 = smul.addr %s152, 2
        %s154 = smul.addr %s153, 4
        %s155 = scalar_lea.vmem %s2, %s154
        %p156 = pneg %p81
        %p157 = pneg %p78
        %p158 = pneg %p107
        %p159 = pneg %p104
        %s160 = sand.u32 %s94, 1
        %s161 = scalar_lea.sflag [#allocation5], %s160
        %s162 = sand.u32 %s94, 1
        %s163 = smul.addr %s162, 8
        %s164 = scalar_lea.vmem [#allocation4], %s163
        %p165 = scmp.lt.s32.totalorder %s18, 1
        %s166 = scalar_select %p165, %s18, 1
        %s167 = smul.addr %s166, 2
        %s168 = smul.addr %s167, 4
        %s169 = scalar_lea.vmem %s2, %s168
        %170 = vst [vmem:[#allocation2] sm:$0xff] 0.0
        %171 = vst [vmem:[#allocation2 + $0x8] sm:$0xff] 0.0
        %172 = vst [vmem:[#allocation2 + $0x10] sm:$0xff] 0.0
        %173 = vst [vmem:[#allocation2 + $0x18] sm:$0xff] 0.0
        %174 = vst [vmem:[#allocation2 + $0x20] sm:$0xff] 0.0
        %175 = vst [vmem:[#allocation2 + $0x28] sm:$0xff] 0.0
        %176 = vst [vmem:[#allocation2 + $0x30] sm:$0xff] 0.0
        %177 = vst [vmem:[#allocation2 + $0x38] sm:$0xff] 0.0
        %v178 = vlaneseq
        %v179 = vand.u32 %v178, 127
        %v180 = vadd.s32 %v179, 128
        %vm181 = vcmp.lt.s32.totalorder %v179, 0
        %v182 = vsub.s32 0, %v179
        %v183 = vsel %vm181, %v182, %v179
        %v184 = vshrl.u32 %v183, 4
        %v185 = vand.u32 %v183, 15
        %v186 = vsub.s32 0, %v185
        %v187 = vsel %vm181, %v186, %v185
        %vm188 = vcmp.lt.s32.totalorder %v180, 0
        %v189 = vsub.s32 0, %v180
        %v190 = vsel %vm188, %v189, %v180
        %v191 = vshrl.u32 %v190, 4
        %v192 = vand.u32 %v190, 15
        %v193 = vsub.s32 0, %v192
        %v194 = vsel %vm188, %v193, %v192
        %vm195 = vcmp.ne.s32.totalorder %v187, 0
        %vm196 = vcmp.ne.s32.totalorder %v194, 0
        %vm197 = vcmp.lt.s32.totalorder %v187, 0
        %vm198 = vcmp.lt.s32.totalorder %v194, 0
        %vm199 = vmand %vm197, %vm195
        %vm200 = vmand %vm198, %vm196
        %v201 = vadd.s32 %v187, 16
        %v202 = vadd.s32 %v194, 16
        %v203 = vsel %vm199, %v201, %v187
        %v204 = vsel %vm200, %v202, %v194
        %vm205 = vcmp.ge.s32.totalorder %v203, 3
        %vm206 = vcmp.ge.s32.totalorder %v204, 3
        %vm207 = vcmp.ge.s32.totalorder %v203, 2
        %vm208 = vcmp.ge.s32.totalorder %v204, 2
        %vm209 = vcmp.ge.s32.totalorder %v203, 1
        %vm210 = vcmp.ge.s32.totalorder %v204, 1
        %vm211 = vcmp.le.s32.totalorder %v203, 14
        %vm212 = vcmp.le.s32.totalorder %v204, 14
        %vm213 = vcmp.le.s32.totalorder %v203, 13
        %vm214 = vcmp.le.s32.totalorder %v204, 13
        %vm215 = vcmp.le.s32.totalorder %v203, 12
        %vm216 = vcmp.le.s32.totalorder %v204, 12
        %v217 = vld [vmem:[%s0] sm:$0xff]
        %v218 = vld [vmem:[%s0 + $0x8] sm:$0xff]
        %s219 = sld [smem:[#allocation3]]
        %v220 = vld [vmem:[%s169] sm:$0xff]
        %v222 = vcombine.high %v220, %v220
        %vm224 = vcmask 1043456
        %v225 = vsel %vm224, %v220, -inf
        %v226 = vrot.slane %v225, 4
        %v227 = vmax.f32 %v225, %v226
        %v228 = vrot.slane %v227, 2
        %v229 = vmax.f32 %v227, %v228
        %v230 = vrot.slane %v229, 1
        %v231 = vmax.f32 %v229, %v230
        %v232 = vsel %vm224, %v222, -inf
        %v233 = vrot.slane %v232, 4
        %v234 = vmax.f32 %v232, %v233
        %v235 = vrot.slane %v234, 2
        %v236 = vmax.f32 %v234, %v235
        %v237 = vrot.slane %v236, 1
        %v238 = vmax.f32 %v236, %v237
        %v239 = vsel %vm224, %v220, 0.0
        %v240 = vrot.slane %v239, 4
        %v241 = vadd.f32 %v239, %v240
        %v242 = vrot.slane %v241, 2
        %v243 = vadd.f32 %v241, %v242
        %v244 = vrot.slane %v243, 1
        %v245 = vadd.f32 %v243, %v244
        %v246 = vsel %vm224, %v222, 0.0
        %v247 = vrot.slane %v246, 4
        %v248 = vadd.f32 %v246, %v247
        %v249 = vrot.slane %v248, 2
        %v250 = vadd.f32 %v248, %v249
        %v251 = vrot.slane %v250, 1
        %v252 = vadd.f32 %v250, %v251
        %v253 = vmul.f32 %v245, 0.25
        %v254 = vmul.f32 %v252, 0.25
        %v257 = vcombine.low %v231, %v238
        %v259 = vunpack.c.l.s4 1966171168
        %v260 = vunpack.c.0.s8 %v259
        %v261 = vlaneseq
        %v262 = vshrl.u32 %v261, 7
        %v263 = vsub.s32 %v260, %v262
        %v264 = vrot.slane %v257, %v263
        %v266 = vunpack.c.l.s4 1966171168
        %v267 = vunpack.c.0.s8 %v266
        %v268 = vlaneseq
        %v269 = vshrl.u32 %v268, 7
        %v270 = vsub.s32 %v267, %v269
        %v271 = vrot.slane %v264, %v270
        %272 = vrot.lane.b32.xlu0 %v271, 48
        %v273 = vpop.permute.xlu0 %272
        %v274 = vrot.slane %v273, 7
        %vm275 = vcmask 392192
        %v276 = vsel %vm275, %v274, %v273
        %v278 = vlaneseq
        %vm279 = vcmp.ge.s32.totalorder %v278, 48
        %vm280 = vcmp.lt.s32.totalorder %v278, 304
        %vm281 = vmand %vm279, %vm280
        %s282 = scalar_lea.vmem [#allocation2], 8
        %283 = vst.msk [vmem:[%s282] ss:$8 sm:$0x7] %vm281, %v276
        %284 = vst.msk [vmem:[%s282] ss:$8 sm:$0x0] %vm281, %v276
        %285 = vrot.lane.b32.xlu0 %v271, 32
        %v286 = vpop.permute.xlu0 %285
        %v287 = vrot.slane %v286, 7
        %vm288 = vcmask 261120
        %v289 = vsel %vm288, %v287, %v286
        %vm291 = vcmp.ge.s32.totalorder %v278, 32
        %vm292 = vcmp.lt.s32.totalorder %v278, 288
        %vm293 = vmand %vm291, %vm292
        %s294 = scalar_lea.vmem [#allocation2], 9
        %295 = vst.msk [vmem:[%s294] ss:$8 sm:$0x7] %vm293, %v289
        %296 = vst.msk [vmem:[%s294] ss:$8 sm:$0x0] %vm293, %v289
        %297 = vrot.lane.b32.xlu0 %v271, 16
        %v298 = vpop.permute.xlu0 %297
        %v299 = vrot.slane %v298, 7
        %vm300 = vcmask 130048
        %v301 = vsel %vm300, %v299, %v298
        %vm303 = vcmp.ge.s32.totalorder %v278, 16
        %vm304 = vcmp.lt.s32.totalorder %v278, 272
        %vm305 = vmand %vm303, %vm304
        %s306 = scalar_lea.vmem [#allocation2], 10
        %307 = vst.msk [vmem:[%s306] ss:$8 sm:$0x7] %vm305, %v301
        %308 = vst.msk [vmem:[%s306] ss:$8 sm:$0x0] %vm305, %v301
        %vm310 = vcmp.ge.s32.totalorder %v278, 0
        %vm311 = vcmp.lt.s32.totalorder %v278, 256
        %vm312 = vmand %vm310, %vm311
        %s313 = scalar_lea.vmem [#allocation2], 11
        %314 = vst.msk [vmem:[%s313] ss:$8 sm:$0x3] %vm312, %v271
        %315 = vst.msk [vmem:[%s313] ss:$8 sm:$0x0] %vm312, %v271
        %316 = vrot.lane.b32.xlu0 %v271, 112
        %v317 = vpop.permute.xlu0 %316
        %v318 = vrot.slane %v317, 7
        %vm319 = vcmask 916480
        %v320 = vsel %vm319, %v318, %v317
        %vm322 = vcmp.ge.s32.totalorder %v278, 112
        %vm323 = vcmp.lt.s32.totalorder %v278, 368
        %vm324 = vmand %vm322, %vm323
        %s325 = scalar_lea.vmem [#allocation2], 4
        %326 = vst.msk [vmem:[%s325] ss:$8 sm:$0x7] %vm324, %v320
        %327 = vst.msk [vmem:[%s325] ss:$8 sm:$0x0] %vm324, %v320
        %328 = vrot.lane.b32.xlu0 %v271, 96
        %v329 = vpop.permute.xlu0 %328
        %v330 = vrot.slane %v329, 7
        %vm331 = vcmask 785408
        %v332 = vsel %vm331, %v330, %v329
        %vm334 = vcmp.ge.s32.totalorder %v278, 96
        %vm335 = vcmp.lt.s32.totalorder %v278, 352
        %vm336 = vmand %vm334, %vm335
        %s337 = scalar_lea.vmem [#allocation2], 5
        %338 = vst.msk [vmem:[%s337] ss:$8 sm:$0x7] %vm336, %v332
        %339 = vst.msk [vmem:[%s337] ss:$8 sm:$0x0] %vm336, %v332
        %340 = vrot.lane.b32.xlu0 %v271, 80
        %v341 = vpop.permute.xlu0 %340
        %v342 = vrot.slane %v341, 7
        %vm343 = vcmask 654336
        %v344 = vsel %vm343, %v342, %v341
        %vm346 = vcmp.ge.s32.totalorder %v278, 80
        %vm347 = vcmp.lt.s32.totalorder %v278, 336
        %vm348 = vmand %vm346, %vm347
        %s349 = scalar_lea.vmem [#allocation2], 6
        %350 = vst.msk [vmem:[%s349] ss:$8 sm:$0x7] %vm348, %v344
        %351 = vst.msk [vmem:[%s349] ss:$8 sm:$0x0] %vm348, %v344
        %v354 = vcombine.low %v253, %v254
        %v356 = vunpack.c.l.s4 1966171168
        %v357 = vunpack.c.0.s8 %v356
        %v358 = vlaneseq
        %v359 = vshrl.u32 %v358, 7
        %v360 = vsub.s32 %v357, %v359
        %v361 = vrot.slane %v354, %v360
        %v363 = vunpack.c.l.s4 1966171168
        %v364 = vunpack.c.0.s8 %v363
        %v365 = vlaneseq
        %v366 = vshrl.u32 %v365, 7
        %v367 = vsub.s32 %v364, %v366
        %v368 = vrot.slane %v361, %v367
        %369 = vrot.lane.b32.xlu0 %v368, 48
        %v370 = vpop.permute.xlu0 %369
        %v371 = vrot.slane %v370, 7
        %v372 = vsel %vm275, %v371, %v370
        %s374 = scalar_lea.vmem [#allocation2], 15
        %375 = vst.msk [vmem:[%s374] ss:$8 sm:$0x7] %vm281, %v372
        %376 = vst.msk [vmem:[%s374] ss:$8 sm:$0x0] %vm281, %v372
        %377 = vrot.lane.b32.xlu0 %v368, 32
        %v378 = vpop.permute.xlu0 %377
        %v379 = vrot.slane %v378, 7
        %v380 = vsel %vm288, %v379, %v378
        %s382 = scalar_lea.vmem [#allocation2], 40
        %383 = vst.msk [vmem:[%s382] ss:$8 sm:$0x7] %vm293, %v380
        %384 = vst.msk [vmem:[%s382] ss:$8 sm:$0x0] %vm293, %v380
        %385 = vrot.lane.b32.xlu0 %v368, 16
        %v386 = vpop.permute.xlu0 %385
        %v387 = vrot.slane %v386, 7
        %v388 = vsel %vm300, %v387, %v386
        %s390 = scalar_lea.vmem [#allocation2], 41
        %391 = vst.msk [vmem:[%s390] ss:$8 sm:$0x7] %vm305, %v388
        %392 = vst.msk [vmem:[%s390] ss:$8 sm:$0x0] %vm305, %v388
        %s394 = scalar_lea.vmem [#allocation2], 42
        %395 = vst.msk [vmem:[%s394] ss:$8 sm:$0x3] %vm312, %v368
        %396 = vst.msk [vmem:[%s394] ss:$8 sm:$0x0] %vm312, %v368
        %397 = vrot.lane.b32.xlu0 %v368, 112
        %v398 = vpop.permute.xlu0 %397
        %v399 = vrot.slane %v398, 7
        %v400 = vsel %vm319, %v399, %v398
        %s402 = scalar_lea.vmem [#allocation2], 35
        %403 = vst.msk [vmem:[%s402] ss:$8 sm:$0x7] %vm324, %v400
        %404 = vst.msk [vmem:[%s402] ss:$8 sm:$0x0] %vm324, %v400
        %405 = vrot.lane.b32.xlu0 %v368, 96
        %v406 = vpop.permute.xlu0 %405
        %v407 = vrot.slane %v406, 7
        %v408 = vsel %vm331, %v407, %v406
        %s410 = scalar_lea.vmem [#allocation2], 36
        %411 = vst.msk [vmem:[%s410] ss:$8 sm:$0x7] %vm336, %v408
        %412 = vst.msk [vmem:[%s410] ss:$8 sm:$0x0] %vm336, %v408
        %413 = vrot.lane.b32.xlu0 %v368, 80
        %v414 = vpop.permute.xlu0 %413
        %v415 = vrot.slane %v414, 7
        %v416 = vsel %vm343, %v415, %v414
        %s418 = scalar_lea.vmem [#allocation2], 37
        %419 = vst.msk [vmem:[%s418] ss:$8 sm:$0x7] %vm348, %v416
        %420 = vst.msk [vmem:[%s418] ss:$8 sm:$0x0] %vm348, %v416
        %v421 = vstv %s219
        %v422 = vld [vmem:[#allocation2] sm:$0xff]
        %v423 = vld [vmem:[#allocation2 + $0x8] sm:$0xff]
        %v424 = vld [vmem:[#allocation2 + $0x10] sm:$0xff]
        %v425 = vld [vmem:[#allocation2 + $0x20] sm:$0xff]
        %v426 = vld [vmem:[#allocation2 + $0x28] sm:$0xff]
        %v427 = vld [vmem:[#allocation2 + $0x30] sm:$0xff]
        %429 = vset.pattern.permute.xlu0 0
        %430 = vperm.xlu0 %429, %v217
        %v431 = vpop.permute.xlu0 %430
        %434 = vset.pattern.permute.xlu0 0
        %435 = vperm.xlu0 %434, %v218
        %v436 = vpop.permute.xlu0 %435
        %v438 = vmul.f32 %v422, %v431
        %v439 = vmul.f32 %v423, %v431
        %v440 = vmul.f32 %v424, %v431
        %v441 = vmul.f32 %v425, %v436
        %v442 = vmul.f32 %v426, %v436
        %v443 = vmul.f32 %v427, %v436
        %vm444 = vcmask 1048552
        %v445 = vsel %vm444, %v438, 0.0
        %v446 = vsel %vm444, %v441, 0.0
        %v447 = vadd.f32 %v445, %v446
        %v448 = vrot.slane %v447, 4
        %v449 = vadd.f32 %v447, %v448
        %v450 = vrot.slane %v449, 2
        %v451 = vadd.f32 %v449, %v450
        %v452 = vrot.slane %v451, 1
        %v453 = vadd.f32 %v451, %v452
        %v454 = vadd.f32 %v439, %v442
        %v455 = vrot.slane %v454, 4
        %v456 = vadd.f32 %v454, %v455
        %v457 = vrot.slane %v456, 2
        %v458 = vadd.f32 %v456, %v457
        %v459 = vrot.slane %v458, 1
        %v460 = vadd.f32 %v458, %v459
        %vm461 = vcmask 1022976
        %v462 = vsel %vm461, %v440, 0.0
        %v463 = vsel %vm461, %v443, 0.0
        %v464 = vadd.f32 %v462, %v463
        %v465 = vrot.slane %v464, 4
        %v466 = vadd.f32 %v464, %v465
        %v467 = vrot.slane %v466, 2
        %v468 = vadd.f32 %v466, %v467
        %v469 = vrot.slane %v468, 1
        %v470 = vadd.f32 %v468, %v469
        %474 = vrot.lane.b32.xlu0 %v453, 3
        %v475 = vpop.permute.xlu0 %474
        %476 = vrot.lane.b32.xlu0 %v460, 3
        %v477 = vpop.permute.xlu0 %476
        %478 = vrot.lane.b32.xlu0 %v470, 3
        %v479 = vpop.permute.xlu0 %478
        %vm480 = vcmask 23552
        %v481 = vsel %vm480, %v475, %v477
        %v482 = vsel %vm480, %v477, %v479
        %v485 = vsel %vm205, %v481, 0.0
        %v486 = vsel %vm206, %v482, 0.0
        %v487 = vadd.f32 %v421, %v485
        %v488 = vadd.f32 %v421, %v486
        %489 = vset.pattern.permute.xlu0 1
        %490 = vperm.xlu0 %489, %v217
        %v491 = vpop.permute.xlu0 %490
        %493 = vset.pattern.permute.xlu0 1
        %494 = vperm.xlu0 %493, %v218
        %v495 = vpop.permute.xlu0 %494
        %v497 = vmul.f32 %v422, %v491
        %v498 = vmul.f32 %v423, %v491
        %v499 = vmul.f32 %v424, %v491
        %v500 = vmul.f32 %v425, %v495
        %v501 = vmul.f32 %v426, %v495
        %v502 = vmul.f32 %v427, %v495
        %vm503 = vcmask 1048560
        %v504 = vsel %vm503, %v497, 0.0
        %v505 = vsel %vm503, %v500, 0.0
        %v506 = vadd.f32 %v504, %v505
        %v507 = vrot.slane %v506, 4
        %v508 = vadd.f32 %v506, %v507
        %v509 = vrot.slane %v508, 2
        %v510 = vadd.f32 %v508, %v509
        %v511 = vrot.slane %v510, 1
        %v512 = vadd.f32 %v510, %v511
        %v513 = vadd.f32 %v498, %v501
        %v514 = vrot.slane %v513, 4
        %v515 = vadd.f32 %v513, %v514
        %v516 = vrot.slane %v515, 2
        %v517 = vadd.f32 %v515, %v516
        %v518 = vrot.slane %v517, 1
        %v519 = vadd.f32 %v517, %v518
        %vm520 = vcmask 1031168
        %v521 = vsel %vm520, %v499, 0.0
        %v522 = vsel %vm520, %v502, 0.0
        %v523 = vadd.f32 %v521, %v522
        %v524 = vrot.slane %v523, 4
        %v525 = vadd.f32 %v523, %v524
        %v526 = vrot.slane %v525, 2
        %v527 = vadd.f32 %v525, %v526
        %v528 = vrot.slane %v527, 1
        %v529 = vadd.f32 %v527, %v528
        %533 = vrot.lane.b32.xlu0 %v512, 2
        %v534 = vpop.permute.xlu0 %533
        %535 = vrot.lane.b32.xlu0 %v519, 2
        %v536 = vpop.permute.xlu0 %535
        %537 = vrot.lane.b32.xlu0 %v529, 2
        %v538 = vpop.permute.xlu0 %537
        %vm539 = vcmask 15360
        %v540 = vsel %vm539, %v534, %v536
        %v541 = vsel %vm539, %v536, %v538
        %v544 = vsel %vm207, %v540, 0.0
        %v545 = vsel %vm208, %v541, 0.0
        %v546 = vadd.f32 %v487, %v544
        %v547 = vadd.f32 %v488, %v545
        %548 = vset.pattern.permute.xlu0 2
        %549 = vperm.xlu0 %548, %v217
        %v550 = vpop.permute.xlu0 %549
        %552 = vset.pattern.permute.xlu0 2
        %553 = vperm.xlu0 %552, %v218
        %v554 = vpop.permute.xlu0 %553
        %v556 = vmul.f32 %v422, %v550
        %v557 = vmul.f32 %v423, %v550
        %v558 = vmul.f32 %v424, %v550
        %v559 = vmul.f32 %v425, %v554
        %v560 = vmul.f32 %v426, %v554
        %v561 = vmul.f32 %v427, %v554
        %vm562 = vcmask 1048568
        %v563 = vsel %vm562, %v556, 0.0
        %v564 = vsel %vm562, %v559, 0.0
        %v565 = vadd.f32 %v563, %v564
        %v566 = vrot.slane %v565, 4
        %v567 = vadd.f32 %v565, %v566
        %v568 = vrot.slane %v567, 2
        %v569 = vadd.f32 %v567, %v568
        %v570 = vrot.slane %v569, 1
        %v571 = vadd.f32 %v569, %v570
        %v572 = vadd.f32 %v557, %v560
        %v573 = vrot.slane %v572, 4
        %v574 = vadd.f32 %v572, %v573
        %v575 = vrot.slane %v574, 2
        %v576 = vadd.f32 %v574, %v575
        %v577 = vrot.slane %v576, 1
        %v578 = vadd.f32 %v576, %v577
        %vm579 = vcmask 1039360
        %v580 = vsel %vm579, %v558, 0.0
        %v581 = vsel %vm579, %v561, 0.0
        %v582 = vadd.f32 %v580, %v581
        %v583 = vrot.slane %v582, 4
        %v584 = vadd.f32 %v582, %v583
        %v585 = vrot.slane %v584, 2
        %v586 = vadd.f32 %v584, %v585
        %v587 = vrot.slane %v586, 1
        %v588 = vadd.f32 %v586, %v587
        %592 = vrot.lane.b32.xlu0 %v571, 1
        %v593 = vpop.permute.xlu0 %592
        %594 = vrot.lane.b32.xlu0 %v578, 1
        %v595 = vpop.permute.xlu0 %594
        %596 = vrot.lane.b32.xlu0 %v588, 1
        %v597 = vpop.permute.xlu0 %596
        %vm598 = vcmask 7168
        %v599 = vsel %vm598, %v593, %v595
        %v600 = vsel %vm598, %v595, %v597
        %v603 = vsel %vm209, %v599, 0.0
        %v604 = vsel %vm210, %v600, 0.0
        %v605 = vadd.f32 %v546, %v603
        %v606 = vadd.f32 %v547, %v604
        %607 = vset.pattern.permute.xlu0 3
        %608 = vperm.xlu0 %607, %v217
        %v609 = vpop.permute.xlu0 %608
        %611 = vset.pattern.permute.xlu0 3
        %612 = vperm.xlu0 %611, %v218
        %v613 = vpop.permute.xlu0 %612
        %v615 = vmul.f32 %v423, %v609
        %v616 = vmul.f32 %v424, %v609
        %v617 = vmul.f32 %v426, %v613
        %v618 = vmul.f32 %v427, %v613
        %v619 = vadd.f32 %v615, %v617
        %v620 = vrot.slane %v619, 4
        %v621 = vadd.f32 %v619, %v620
        %v622 = vrot.slane %v621, 2
        %v623 = vadd.f32 %v621, %v622
        %v624 = vrot.slane %v623, 1
        %v625 = vadd.f32 %v623, %v624
        %v626 = vadd.f32 %v616, %v618
        %v627 = vrot.slane %v626, 4
        %v628 = vadd.f32 %v626, %v627
        %v629 = vrot.slane %v628, 2
        %v630 = vadd.f32 %v628, %v629
        %v631 = vrot.slane %v630, 1
        %v632 = vadd.f32 %v630, %v631
        %v633 = vadd.f32 %v605, %v625
        %v634 = vadd.f32 %v606, %v632
        %v635 = vld [vmem:[#allocation2 + $0x8] sm:$0xff]
        %v636 = vld [vmem:[#allocation2 + $0x10] sm:$0xff]
        %v637 = vld [vmem:[#allocation2 + $0x18] sm:$0xff]
        %v638 = vld [vmem:[#allocation2 + $0x28] sm:$0xff]
        %v639 = vld [vmem:[#allocation2 + $0x30] sm:$0xff]
        %v640 = vld [vmem:[#allocation2 + $0x38] sm:$0xff]
        %641 = vset.pattern.permute.xlu0 4
        %642 = vperm.xlu0 %641, %v217
        %v643 = vpop.permute.xlu0 %642
        %645 = vset.pattern.permute.xlu0 4
        %646 = vperm.xlu0 %645, %v218
        %v647 = vpop.permute.xlu0 %646
        %v649 = vmul.f32 %v635, %v643
        %v650 = vmul.f32 %v636, %v643
        %v651 = vmul.f32 %v637, %v643
        %v652 = vmul.f32 %v638, %v647
        %v653 = vmul.f32 %v639, %v647
        %v654 = vmul.f32 %v640, %v647
        %vm655 = vcmask 1047560
        %v656 = vsel %vm655, %v649, 0.0
        %v657 = vsel %vm655, %v652, 0.0
        %v658 = vadd.f32 %v656, %v657
        %v659 = vrot.slane %v658, 4
        %v660 = vadd.f32 %v658, %v659
        %v661 = vrot.slane %v660, 2
        %v662 = vadd.f32 %v660, %v661
        %v663 = vrot.slane %v662, 1
        %v664 = vadd.f32 %v662, %v663
        %v665 = vadd.f32 %v650, %v653
        %v666 = vrot.slane %v665, 4
        %v667 = vadd.f32 %v665, %v666
        %v668 = vrot.slane %v667, 2
        %v669 = vadd.f32 %v667, %v668
        %v670 = vrot.slane %v669, 1
        %v671 = vadd.f32 %v669, %v670
        %v672 = vsel %vm598, %v651, 0.0
        %v673 = vsel %vm598, %v654, 0.0
        %v674 = vadd.f32 %v672, %v673
        %v675 = vrot.slane %v674, 4
        %v676 = vadd.f32 %v674, %v675
        %v677 = vrot.slane %v676, 2
        %v678 = vadd.f32 %v676, %v677
        %v679 = vrot.slane %v678, 1
        %v680 = vadd.f32 %v678, %v679
        %684 = vrot.lane.b32.xlu0 %v664, 127
        %v685 = vpop.permute.xlu0 %684
        %686 = vrot.lane.b32.xlu0 %v671, 127
        %v687 = vpop.permute.xlu0 %686
        %688 = vrot.lane.b32.xlu0 %v680, 127
        %v689 = vpop.permute.xlu0 %688
        %v690 = vsel %vm579, %v685, %v687
        %v691 = vsel %vm579, %v687, %v689
        %v694 = vsel %vm211, %v690, 0.0
        %v695 = vsel %vm212, %v691, 0.0
        %v696 = vadd.f32 %v633, %v694
        %v697 = vadd.f32 %v634, %v695
        %698 = vset.pattern.permute.xlu0 5
        %699 = vperm.xlu0 %698, %v217
        %v700 = vpop.permute.xlu0 %699
        %702 = vset.pattern.permute.xlu0 5
        %703 = vperm.xlu0 %702, %v218
        %v704 = vpop.permute.xlu0 %703
        %v706 = vmul.f32 %v635, %v700
        %v707 = vmul.f32 %v636, %v700
        %v708 = vmul.f32 %v637, %v700
        %v709 = vmul.f32 %v638, %v704
        %v710 = vmul.f32 %v639, %v704
        %v711 = vmul.f32 %v640, %v704
        %vm712 = vcmask 1047568
        %v713 = vsel %vm712, %v706, 0.0
        %v714 = vsel %vm712, %v709, 0.0
        %v715 = vadd.f32 %v713, %v714
        %v716 = vrot.slane %v715, 4
        %v717 = vadd.f32 %v715, %v716
        %v718 = vrot.slane %v717, 2
        %v719 = vadd.f32 %v717, %v718
        %v720 = vrot.slane %v719, 1
        %v721 = vadd.f32 %v719, %v720
        %v722 = vadd.f32 %v707, %v710
        %v723 = vrot.slane %v722, 4
        %v724 = vadd.f32 %v722, %v723
        %v725 = vrot.slane %v724, 2
        %v726 = vadd.f32 %v724, %v725
        %v727 = vrot.slane %v726, 1
        %v728 = vadd.f32 %v726, %v727
        %v729 = vsel %vm539, %v708, 0.0
        %v730 = vsel %vm539, %v711, 0.0
        %v731 = vadd.f32 %v729, %v730
        %v732 = vrot.slane %v731, 4
        %v733 = vadd.f32 %v731, %v732
        %v734 = vrot.slane %v733, 2
        %v735 = vadd.f32 %v733, %v734
        %v736 = vrot.slane %v735, 1
        %v737 = vadd.f32 %v735, %v736
        %741 = vrot.lane.b32.xlu0 %v721, 126
        %v742 = vpop.permute.xlu0 %741
        %743 = vrot.lane.b32.xlu0 %v728, 126
        %v744 = vpop.permute.xlu0 %743
        %745 = vrot.lane.b32.xlu0 %v737, 126
        %v746 = vpop.permute.xlu0 %745
        %v747 = vsel %vm520, %v742, %v744
        %v748 = vsel %vm520, %v744, %v746
        %v751 = vsel %vm213, %v747, 0.0
        %v752 = vsel %vm214, %v748, 0.0
        %v753 = vadd.f32 %v696, %v751
        %v754 = vadd.f32 %v697, %v752
        %755 = vset.pattern.permute.xlu0 6
        %756 = vperm.xlu0 %755, %v217
        %v757 = vpop.permute.xlu0 %756
        %759 = vset.pattern.permute.xlu0 6
        %760 = vperm.xlu0 %759, %v218
        %v761 = vpop.permute.xlu0 %760
        %v763 = vmul.f32 %v635, %v757
        %v764 = vmul.f32 %v636, %v757
        %v765 = vmul.f32 %v637, %v757
        %v766 = vmul.f32 %v638, %v761
        %v767 = vmul.f32 %v639, %v761
        %v768 = vmul.f32 %v640, %v761
        %vm769 = vcmask 1047576
        %v770 = vsel %vm769, %v763, 0.0
        %v771 = vsel %vm769, %v766, 0.0
        %v772 = vadd.f32 %v770, %v771
        %v773 = vrot.slane %v772, 4
        %v774 = vadd.f32 %v772, %v773
        %v775 = vrot.slane %v774, 2
        %v776 = vadd.f32 %v774, %v775
        %v777 = vrot.slane %v776, 1
        %v778 = vadd.f32 %v776, %v777
        %v779 = vadd.f32 %v764, %v767
        %v780 = vrot.slane %v779, 4
        %v781 = vadd.f32 %v779, %v780
        %v782 = vrot.slane %v781, 2
        %v783 = vadd.f32 %v781, %v782
        %v784 = vrot.slane %v783, 1
        %v785 = vadd.f32 %v783, %v784
        %v786 = vsel %vm480, %v765, 0.0
        %v787 = vsel %vm480, %v768, 0.0
        %v788 = vadd.f32 %v786, %v787
        %v789 = vrot.slane %v788, 4
        %v790 = vadd.f32 %v788, %v789
        %v791 = vrot.slane %v790, 2
        %v792 = vadd.f32 %v790, %v791
        %v793 = vrot.slane %v792, 1
        %v794 = vadd.f32 %v792, %v793
        %798 = vrot.lane.b32.xlu0 %v778, 125
        %v799 = vpop.permute.xlu0 %798
        %800 = vrot.lane.b32.xlu0 %v785, 125
        %v801 = vpop.permute.xlu0 %800
        %802 = vrot.lane.b32.xlu0 %v794, 125
        %v803 = vpop.permute.xlu0 %802
        %v804 = vsel %vm461, %v799, %v801
        %v805 = vsel %vm461, %v801, %v803
        %v808 = vsel %vm215, %v804, 0.0
        %v809 = vsel %vm216, %v805, 0.0
        %v810 = vadd.f32 %v753, %v808
        %v811 = vadd.f32 %v754, %v809
        %v812 = vxor.u32 %v810, 2147483648
        %v813 = vxor.u32 %v811, 2147483648
        %v814 = vmul.f32 %v812, 1.442695
        %v815 = vpow.pop %v814
        %v816 = vmul.f32 %v813, 1.442695
        %v817 = vpow.pop %v816
        %v818 = vadd.f32 %v815, 1.0
        %v819 = vadd.f32 %v817, 1.0
        %v820 = vrcp.pop %v818
        %v821 = vmul.f32 1.0, %v820
        %v822 = vrcp.pop %v819
        %v823 = vmul.f32 1.0, %v822
        %v824 = vlaneseq
        %v825 = vshrl.u32 %v824, 7
        %v826 = vsub.s32 0, %v825
        %v827 = vrot.slane %v821, %v826
        %v828 = vlaneseq
        %v829 = vshrl.u32 %v828, 7
        %v830 = vsub.s32 0, %v829
        %v831 = vrot.slane %v823, %v830
        %v832 = vld [vmem:[%s169] sm:$0xff]
        %v834 = vcombine.high %v832, %v832
        %v836 = vmul.f32 %v827, %v832
        %v837 = vmul.f32 %v831, %v834
        %v840 = vcombine.low %v836, %v837
        %842 = vst [vmem:[%s164] sm:$0xff] %v840
        %s843 = sand.u32 %s94, 1
        %s844 = scalar_lea.sflag [#allocation5], %s843
        %s845 = sand.u32 %s94, 1
        %s846 = smul.addr %s845, 8
        %s847 = scalar_lea.vmem [#allocation4], %s846
        // Predicated region
        $region33: #{tpu_custom_call.1} parent=31 // pred_check
          %p848 = pneg %p104
        $region34: #{tpu_custom_call.1} parent=31 // pred_check_branch
          %850 = sbr.rel (%p848) target = $region36
        $region35: #{tpu_custom_call.1} parent=31 // pred_region
          %s852 = ssub.s32 128, 128
          %853 = vsyncadd %s844, %s852
          %s854 = smul.addr %s18, 2
          %s855 = smul.addr %s854, 64
          %s856 = scalar_lea.hbm %s3, %s855
          %s858 = sshll.u32 %s847, 4
          %s859 = int_to_ptr.vmem [resolvable:$true] %s858
          %861 = dma.vmem_to_hbm [thread:$0]  %s859, 128, %s856, %s844
        $region36: #{tpu_custom_call.1} parent=31 // pred_fallthru
          _
      $region32: #{tpu_custom_call.1} parent=5 // pred_fallthru
        _
      %p862 = scmp.le.s32.totalorder 2, %s13
      // Predicated region
      $region37: #{tpu_custom_call.1} parent=5 // pred_check
        %p863 = pneg %p862
      $region38: #{tpu_custom_call.1} parent=5 // pred_check_branch
        %865 = sbr.rel (%p863) target = $region40
      $region39: #{tpu_custom_call.1} parent=5 // pred_region
        %s866 = ssub.s32 %s13, 2
        // Predicated region
        $region41: #{tpu_custom_call.1} parent=39 // pred_check
          %p867 = pneg %p110
        $region42: #{tpu_custom_call.1} parent=39 // pred_check_branch
          %869 = sbr.rel (%p867) target = $region44
        $region43: #{tpu_custom_call.1} parent=39 // pred_region
          %s870 = sand.u32 %s95, 1
          %s871 = scalar_lea.sflag [#allocation5], %s870
          %s872 = sand.u32 %s95, 1
          %s873 = smul.addr %s872, 8
          %s874 = scalar_lea.vmem [#allocation4], %s873
          %875 = dma.done %s871, 128
        $region44: #{tpu_custom_call.1} parent=39 // pred_fallthru
          _
      $region40: #{tpu_custom_call.1} parent=5 // pred_fallthru
        _
    $region6: #{tpu_custom_call.1} parent=1 // loop_footer
      %s17 = sadd.s32 1, %s13
    $region7: #{tpu_custom_call.1} parent=1 // loop_footer_branch
      %12 = sbr.rel target = $region3
    $region8: #{tpu_custom_call.1} parent=1 // loop_exit
      _
    %876 = vsyncpa [#allocation5], 1
    %s877 = scalar_lea.sflag [#allocation5], 1
    %878 = vsyncpa %s877, 1

</llo_original>
